<compile_context>
chip_gen: v7x
topology: tpu7x:2x2x1
jax: 0.10.0
libtpu: 0.0.40
codegen_flags: <defaults>
</compile_context>

<pallas_src>
import functools

import jax
import jax.numpy as jnp
from jax.experimental import pallas as pl
from jax.experimental.pallas import tpu as pltpu

_BN_EPS = 1e-5
_LANE = 128


def _round_up(n, m):
    return ((n + m - 1) // m) * m


def _pad_to(a, shape):
    """Zero-pad array `a` up to `shape` (top-left corner keeps the data)."""
    out = jnp.zeros(shape, a.dtype)
    return out.at[tuple(slice(0, s) for s in a.shape)].set(a)


# ----------------------------- fused Pallas kernel ---------------------------

def _scarf_fused_kernel(*refs, kinds, rate, batch):
    """Corruption + encoder MLP + head MLP for clean & corrupted branches.

    refs = (x, u, x_random, <per-layer params>, out)
      hidden layer params: w, b, gamma, beta    (lane-padded)
      final  layer params: w, b
    out: (2*batch, H_pad); rows [0,batch) clean, [batch,2*batch) corrupted.
    """
    x_ref, u_ref, xr_ref = refs[0], refs[1], refs[2]
    n_param = sum(4 if k == "hidden" else 2 for k in kinds)
    param_refs = refs[3:3 + n_param]
    out_ref = refs[3 + n_param]

    x = x_ref[...]
    # corruption folded into the kernel: where(u > rate, x_random, x)
    x_corr = jnp.where(u_ref[...] > rate, xr_ref[...], x)
    h = jnp.concatenate([x, x_corr], axis=0)                 # (2B, D_pad)

    # row mask distinguishing the clean half from the corrupted half
    rows = jax.lax.broadcasted_iota(jnp.int32, (2 * batch, 1), 0)
    is_clean = rows < batch                                   # (2B, 1) bool
    inv_n = jnp.float32(1.0 / batch)

    idx = 0
    for kind in kinds:                                        # unrolled at trace time
        w = param_refs[idx][...]
        b = param_refs[idx + 1][...]                          # (1, H_pad), hoisted load
        h = jnp.dot(h, w, preferred_element_type=jnp.float32) + b
        if kind == "hidden":
            gamma = param_refs[idx + 2][...]
            beta = param_refs[idx + 3][...]
            # One-pass BN stats (sum & sum-of-squares), separately per branch
            # so each branch is normalized with its own batch statistics.
            h_clean = jnp.where(is_clean, h, 0.0)
            h_corr = h - h_clean
            mean_c = jnp.sum(h_clean, axis=0, keepdims=True) * inv_n
            mean_k = jnp.sum(h_corr, axis=0, keepdims=True) * inv_n
            msq_c = jnp.sum(h_clean * h_clean, axis=0, keepdims=True) * inv_n
            msq_k = jnp.sum(h_corr * h_corr, axis=0, keepdims=True) * inv_n
            var_c = jnp.maximum(msq_c - mean_c * mean_c, 0.0)
            var_k = jnp.maximum(msq_k - mean_k * mean_k, 0.0)
            mean = jnp.where(is_clean, mean_c, mean_k)        # (2B, H_pad)
            var = jnp.where(is_clean, var_c, var_k)
            h = (h - mean) * jax.lax.rsqrt(var + _BN_EPS)
            h = jnp.maximum(h * gamma + beta, 0.0)
            # Dropout(p=0.0) is the identity.
            idx += 4
        else:
            idx += 2
    out_ref[...] = h


def scarf_fused_forward(x_p, u_p, xr_p, flat_params, kinds, rate, batch, h_pad):
    n_in = 3 + len(flat_params)
    vmem = pl.BlockSpec(memory_space=pltpu.MemorySpace.VMEM)
    return pl.pallas_call(
        functools.partial(_scarf_fused_kernel, kinds=tuple(kinds),
                          rate=float(rate), batch=int(batch)),
        out_shape=jax.ShapeDtypeStruct((2 * batch, h_pad), jnp.float32),
        in_specs=[vmem] * n_in,
        out_specs=vmem,
    )(x_p, u_p, xr_p, *flat_params)
    # TODO(synk): if batch is scaled up for real training, add a batch grid
    # (parallel axis) and a cross-tile BN reduction instead of whole-array VMEM.


# ----------------------------- parameter setup ------------------------------

def _init_linear(key, in_dim, out_dim):
    """PyTorch-style nn.Linear init: U(-1/sqrt(in_dim), 1/sqrt(in_dim))."""
    kw, kb = jax.random.split(key)
    bound = 1.0 / jnp.sqrt(jnp.float32(in_dim))
    w = jax.random.uniform(kw, (in_dim, out_dim), jnp.float32, -bound, bound)
    b = jax.random.uniform(kb, (out_dim,), jnp.float32, -bound, bound)
    return w, b


def init_mlp_params(key, input_dim, hidden_dim, num_hidden):
    """Matches MLP.__init__: (num_hidden-1) hidden blocks + final Linear."""
    params = []
    in_dim = input_dim
    keys = jax.random.split(key, num_hidden)
    for i in range(num_hidden - 1):
        w, b = _init_linear(keys[i], in_dim, hidden_dim)
        params.append(dict(kind="hidden", w=w, b=b,
                           gamma=jnp.ones((hidden_dim,), jnp.float32),
                           beta=jnp.zeros((hidden_dim,), jnp.float32)))
        in_dim = hidden_dim
    w, b = _init_linear(keys[num_hidden - 1], in_dim, hidden_dim)
    params.append(dict(kind="final", w=w, b=b))
    return params


def pad_params(layers, d_pad, h_pad):
    """Flatten + zero-pad layer params to lane-dense (128-wide) shapes."""
    flat = []
    in_dim_p = d_pad
    for layer in layers:
        flat.append(_pad_to(layer["w"], (in_dim_p, h_pad)))
        flat.append(_pad_to(layer["b"].reshape(1, -1), (1, h_pad)))
        if layer["kind"] == "hidden":
            flat.append(_pad_to(layer["gamma"].reshape(1, -1), (1, h_pad)))
            flat.append(_pad_to(layer["beta"].reshape(1, -1), (1, h_pad)))
        in_dim_p = h_pad
    return flat


# ----------------------------- pure-JAX reference ----------------------------

def _mlp_ref(h, layers):
    for layer in layers:
        h = jnp.dot(h, layer["w"]) + layer["b"]
        if layer["kind"] == "hidden":
            mean = jnp.mean(h, axis=0, keepdims=True)
            var = jnp.mean(jnp.square(h - mean), axis=0, keepdims=True)
            h = (h - mean) * jax.lax.rsqrt(var + _BN_EPS)
            h = jnp.maximum(h * layer["gamma"] + layer["beta"], 0.0)
    return h


# ----------------------------- main ------------------------------------------

if __name__ == "__main__":
    # SCARF hyperparameters (small, consistent with the module signature)
    batch_size = 8
    input_dim = 16
    dim_hidden_encoder = 32
    num_hidden_encoder = 2
    dim_hidden_head = 32
    num_hidden_head = 2
    corruption_rate = 0.6

    root = jax.random.PRNGKey(0)
    k_enc, k_head, k_x, k_u, k_r = jax.random.split(root, 5)

    enc_layers = init_mlp_params(k_enc, input_dim, dim_hidden_encoder,
                                 num_hidden_encoder)
    head_layers = init_mlp_params(k_head, dim_hidden_encoder, dim_hidden_head,
                                  num_hidden_head)
    layers = enc_layers + head_layers
    kinds = [l["kind"] for l in layers]

    features_low = jnp.zeros((input_dim,), jnp.float32)
    features_high = jnp.full((input_dim,), 2.0, jnp.float32)

    x = jax.random.uniform(k_x, (batch_size, input_dim), jnp.float32, 0.0, 2.0)
    # TODO(synk): torch RNG streams are not reproducible in JAX; the draws
    # below only match the distributions (rand_like, Uniform(low, high)).
    u = jax.random.uniform(k_u, (batch_size, input_dim), jnp.float32)
    u01 = jax.random.uniform(k_r, (batch_size, input_dim), jnp.float32)
    x_random = features_low + u01 * (features_high - features_low)

    # Lane-dense padding (feature dims -> multiples of 128)
    d_pad = _round_up(input_dim, _LANE)
    h_pad = _round_up(max(dim_hidden_encoder, dim_hidden_head), _LANE)

    x_p = _pad_to(x, (batch_size, d_pad))
    u_p = _pad_to(u, (batch_size, d_pad))
    xr_p = _pad_to(x_random, (batch_size, d_pad))
    flat_params = pad_params(layers, d_pad, h_pad)

    out = scarf_fused_forward(x_p, u_p, xr_p, flat_params, kinds,
                              corruption_rate, batch_size, h_pad)
    jax.block_until_ready(out)

    emb = out[:batch_size, :dim_hidden_head]
    emb_c = out[batch_size:, :dim_hidden_head]

    # correctness check against a plain-JAX reference of the same semantics
    x_corr = jnp.where(u > corruption_rate, x_random, x)
    ref_emb = _mlp_ref(_mlp_ref(x, enc_layers), head_layers)
    ref_emb_c = _mlp_ref(_mlp_ref(x_corr, enc_layers), head_layers)

    assert emb.shape == (batch_size, dim_hidden_head)
    assert emb_c.shape == (batch_size, dim_hidden_head)
    assert bool(jnp.all(jnp.isfinite(emb))) and bool(jnp.all(jnp.isfinite(emb_c)))
    assert jnp.allclose(emb, ref_emb, atol=5e-2, rtol=5e-2)
    assert jnp.allclose(emb_c, ref_emb_c, atol=5e-2, rtol=5e-2)
    print("KERNEL_OK")
</pallas_src>

<mosaic_0001>
module attributes {stable_mosaic.version = 11 : i64} {
  func.func @_scarf_fused_kernel(%arg0: memref<8x128xf32, #tpu.memory_space<vmem>>, %arg1: memref<8x128xf32, #tpu.memory_space<vmem>>, %arg2: memref<8x128xf32, #tpu.memory_space<vmem>>, %arg3: memref<128x128xf32, #tpu.memory_space<vmem>>, %arg4: memref<1x128xf32, #tpu.memory_space<vmem>>, %arg5: memref<1x128xf32, #tpu.memory_space<vmem>>, %arg6: memref<1x128xf32, #tpu.memory_space<vmem>>, %arg7: memref<128x128xf32, #tpu.memory_space<vmem>>, %arg8: memref<1x128xf32, #tpu.memory_space<vmem>>, %arg9: memref<128x128xf32, #tpu.memory_space<vmem>>, %arg10: memref<1x128xf32, #tpu.memory_space<vmem>>, %arg11: memref<1x128xf32, #tpu.memory_space<vmem>>, %arg12: memref<1x128xf32, #tpu.memory_space<vmem>>, %arg13: memref<128x128xf32, #tpu.memory_space<vmem>>, %arg14: memref<1x128xf32, #tpu.memory_space<vmem>>, %arg15: memref<16x128xf32, #tpu.memory_space<vmem>>) attributes {dimension_semantics = [], scalar_prefetch = 0 : i64, scratch_operands = 0 : i64, tpu.core_type = #tpu.core_type<tc>} {
    %c0 = arith.constant 0 : index
    %c0_0 = arith.constant 0 : index
    %0 = vector.load %arg0[%c0, %c0_0] : memref<8x128xf32, #tpu.memory_space<vmem>>, vector<8x128xf32>
    %c0_1 = arith.constant 0 : index
    %c0_2 = arith.constant 0 : index
    %1 = vector.load %arg1[%c0_1, %c0_2] : memref<8x128xf32, #tpu.memory_space<vmem>>, vector<8x128xf32>
    %cst = arith.constant 6.000000e-01 : f32
    %2 = vector.broadcast %cst : f32 to vector<8x128xf32>
    %3 = arith.cmpf ogt, %1, %2 : vector<8x128xf32>
    %c0_3 = arith.constant 0 : index
    %c0_4 = arith.constant 0 : index
    %4 = vector.load %arg2[%c0_3, %c0_4] : memref<8x128xf32, #tpu.memory_space<vmem>>, vector<8x128xf32>
    %5 = arith.select %3, %4, %0 : vector<8x128xi1>, vector<8x128xf32>
    %6 = tpu.concatenate %0, %5 in 0 : vector<8x128xf32>, vector<8x128xf32> -> vector<16x128xf32>
    %7 = tpu.iota {dimensions = array<i32: 0>} : vector<16x1xi32>
    %c8_i32 = arith.constant 8 : i32
    %8 = vector.broadcast %c8_i32 : i32 to vector<16x1xi32>
    %9 = arith.cmpi slt, %7, %8 : vector<16x1xi32>
    %c0_5 = arith.constant 0 : index
    %c0_6 = arith.constant 0 : index
    %10 = vector.load %arg3[%c0_5, %c0_6] : memref<128x128xf32, #tpu.memory_space<vmem>>, vector<128x128xf32>
    %c0_7 = arith.constant 0 : index
    %c0_8 = arith.constant 0 : index
    %11 = vector.load %arg4[%c0_7, %c0_8] : memref<1x128xf32, #tpu.memory_space<vmem>>, vector<1x128xf32>
    %cst_9 = arith.constant dense<0.000000e+00> : vector<16x128xf32>
    %12 = tpu.matmul %6, %10, %cst_9 {dimension_numbers = #tpu.dot_dimension_numbers<[1], [0], [0], [1], [0, 0, 1, 1], [], []>} : vector<16x128xf32>, vector<128x128xf32>, vector<16x128xf32> -> vector<16x128xf32>
    %13 = vector.broadcast %11 : vector<1x128xf32> to vector<16x128xf32>
    %14 = arith.addf %12, %13 : vector<16x128xf32>
    %c0_10 = arith.constant 0 : index
    %c0_11 = arith.constant 0 : index
    %15 = vector.load %arg5[%c0_10, %c0_11] : memref<1x128xf32, #tpu.memory_space<vmem>>, vector<1x128xf32>
    %c0_12 = arith.constant 0 : index
    %c0_13 = arith.constant 0 : index
    %16 = vector.load %arg6[%c0_12, %c0_13] : memref<1x128xf32, #tpu.memory_space<vmem>>, vector<1x128xf32>
    %cst_14 = arith.constant 0.000000e+00 : f32
    %17 = vector.shape_cast %9 : vector<16x1xi1> to vector<16x1xi1>
    %18 = vector.broadcast %17 : vector<16x1xi1> to vector<16x128xi1>
    %19 = vector.broadcast %cst_14 : f32 to vector<16x128xf32>
    %20 = arith.select %18, %14, %19 : vector<16x128xi1>, vector<16x128xf32>
    %21 = arith.subf %14, %20 : vector<16x128xf32>
    %cst_15 = arith.constant dense<0.000000e+00> : vector<128xf32>
    %22 = vector.multi_reduction <add>, %20, %cst_15 [0] : vector<16x128xf32> to vector<128xf32>
    %23 = vector.shape_cast %22 : vector<128xf32> to vector<1x128xf32>
    %cst_16 = arith.constant 1.250000e-01 : f32
    %24 = vector.broadcast %cst_16 : f32 to vector<1x128xf32>
    %25 = arith.mulf %23, %24 : vector<1x128xf32>
    %cst_17 = arith.constant dense<0.000000e+00> : vector<128xf32>
    %26 = vector.multi_reduction <add>, %21, %cst_17 [0] : vector<16x128xf32> to vector<128xf32>
    %27 = vector.shape_cast %26 : vector<128xf32> to vector<1x128xf32>
    %cst_18 = arith.constant 1.250000e-01 : f32
    %28 = vector.broadcast %cst_18 : f32 to vector<1x128xf32>
    %29 = arith.mulf %27, %28 : vector<1x128xf32>
    %30 = arith.mulf %20, %20 : vector<16x128xf32>
    %cst_19 = arith.constant dense<0.000000e+00> : vector<128xf32>
    %31 = vector.multi_reduction <add>, %30, %cst_19 [0] : vector<16x128xf32> to vector<128xf32>
    %32 = vector.shape_cast %31 : vector<128xf32> to vector<1x128xf32>
    %cst_20 = arith.constant 1.250000e-01 : f32
    %33 = vector.broadcast %cst_20 : f32 to vector<1x128xf32>
    %34 = arith.mulf %32, %33 : vector<1x128xf32>
    %35 = arith.mulf %21, %21 : vector<16x128xf32>
    %cst_21 = arith.constant dense<0.000000e+00> : vector<128xf32>
    %36 = vector.multi_reduction <add>, %35, %cst_21 [0] : vector<16x128xf32> to vector<128xf32>
    %37 = vector.shape_cast %36 : vector<128xf32> to vector<1x128xf32>
    %cst_22 = arith.constant 1.250000e-01 : f32
    %38 = vector.broadcast %cst_22 : f32 to vector<1x128xf32>
    %39 = arith.mulf %37, %38 : vector<1x128xf32>
    %40 = arith.mulf %25, %25 : vector<1x128xf32>
    %41 = arith.subf %34, %40 : vector<1x128xf32>
    %cst_23 = arith.constant 0.000000e+00 : f32
    %42 = vector.broadcast %cst_23 : f32 to vector<1x128xf32>
    %43 = arith.maximumf %41, %42 : vector<1x128xf32>
    %44 = arith.mulf %29, %29 : vector<1x128xf32>
    %45 = arith.subf %39, %44 : vector<1x128xf32>
    %cst_24 = arith.constant 0.000000e+00 : f32
    %46 = vector.broadcast %cst_24 : f32 to vector<1x128xf32>
    %47 = arith.maximumf %45, %46 : vector<1x128xf32>
    %48 = vector.shape_cast %9 : vector<16x1xi1> to vector<16x1xi1>
    %49 = vector.broadcast %48 : vector<16x1xi1> to vector<16x128xi1>
    %50 = vector.shape_cast %25 : vector<1x128xf32> to vector<1x128xf32>
    %51 = vector.broadcast %50 : vector<1x128xf32> to vector<16x128xf32>
    %52 = vector.shape_cast %29 : vector<1x128xf32> to vector<1x128xf32>
    %53 = vector.broadcast %52 : vector<1x128xf32> to vector<16x128xf32>
    %54 = arith.select %49, %51, %53 : vector<16x128xi1>, vector<16x128xf32>
    %55 = vector.shape_cast %9 : vector<16x1xi1> to vector<16x1xi1>
    %56 = vector.broadcast %55 : vector<16x1xi1> to vector<16x128xi1>
    %57 = vector.shape_cast %43 : vector<1x128xf32> to vector<1x128xf32>
    %58 = vector.broadcast %57 : vector<1x128xf32> to vector<16x128xf32>
    %59 = vector.shape_cast %47 : vector<1x128xf32> to vector<1x128xf32>
    %60 = vector.broadcast %59 : vector<1x128xf32> to vector<16x128xf32>
    %61 = arith.select %56, %58, %60 : vector<16x128xi1>, vector<16x128xf32>
    %62 = arith.subf %14, %54 : vector<16x128xf32>
    %cst_25 = arith.constant 9.99999974E-6 : f32
    %63 = vector.broadcast %cst_25 : f32 to vector<16x128xf32>
    %64 = arith.addf %61, %63 : vector<16x128xf32>
    %65 = math.rsqrt %64 : vector<16x128xf32>
    %66 = arith.mulf %62, %65 : vector<16x128xf32>
    %67 = vector.broadcast %15 : vector<1x128xf32> to vector<16x128xf32>
    %68 = arith.mulf %66, %67 : vector<16x128xf32>
    %69 = vector.broadcast %16 : vector<1x128xf32> to vector<16x128xf32>
    %70 = arith.addf %68, %69 : vector<16x128xf32>
    %cst_26 = arith.constant 0.000000e+00 : f32
    %71 = vector.broadcast %cst_26 : f32 to vector<16x128xf32>
    %72 = arith.maximumf %70, %71 : vector<16x128xf32>
    %c0_27 = arith.constant 0 : index
    %c0_28 = arith.constant 0 : index
    %73 = vector.load %arg7[%c0_27, %c0_28] : memref<128x128xf32, #tpu.memory_space<vmem>>, vector<128x128xf32>
    %c0_29 = arith.constant 0 : index
    %c0_30 = arith.constant 0 : index
    %74 = vector.load %arg8[%c0_29, %c0_30] : memref<1x128xf32, #tpu.memory_space<vmem>>, vector<1x128xf32>
    %cst_31 = arith.constant dense<0.000000e+00> : vector<16x128xf32>
    %75 = tpu.matmul %72, %73, %cst_31 {dimension_numbers = #tpu.dot_dimension_numbers<[1], [0], [0], [1], [0, 0, 1, 1], [], []>} : vector<16x128xf32>, vector<128x128xf32>, vector<16x128xf32> -> vector<16x128xf32>
    %76 = vector.broadcast %74 : vector<1x128xf32> to vector<16x128xf32>
    %77 = arith.addf %75, %76 : vector<16x128xf32>
    %c0_32 = arith.constant 0 : index
    %c0_33 = arith.constant 0 : index
    %78 = vector.load %arg9[%c0_32, %c0_33] : memref<128x128xf32, #tpu.memory_space<vmem>>, vector<128x128xf32>
    %c0_34 = arith.constant 0 : index
    %c0_35 = arith.constant 0 : index
    %79 = vector.load %arg10[%c0_34, %c0_35] : memref<1x128xf32, #tpu.memory_space<vmem>>, vector<1x128xf32>
    %cst_36 = arith.constant dense<0.000000e+00> : vector<16x128xf32>
    %80 = tpu.matmul %77, %78, %cst_36 {dimension_numbers = #tpu.dot_dimension_numbers<[1], [0], [0], [1], [0, 0, 1, 1], [], []>} : vector<16x128xf32>, vector<128x128xf32>, vector<16x128xf32> -> vector<16x128xf32>
    %81 = vector.broadcast %79 : vector<1x128xf32> to vector<16x128xf32>
    %82 = arith.addf %80, %81 : vector<16x128xf32>
    %c0_37 = arith.constant 0 : index
    %c0_38 = arith.constant 0 : index
    %83 = vector.load %arg11[%c0_37, %c0_38] : memref<1x128xf32, #tpu.memory_space<vmem>>, vector<1x128xf32>
    %c0_39 = arith.constant 0 : index
    %c0_40 = arith.constant 0 : index
    %84 = vector.load %arg12[%c0_39, %c0_40] : memref<1x128xf32, #tpu.memory_space<vmem>>, vector<1x128xf32>
    %cst_41 = arith.constant 0.000000e+00 : f32
    %85 = vector.shape_cast %9 : vector<16x1xi1> to vector<16x1xi1>
    %86 = vector.broadcast %85 : vector<16x1xi1> to vector<16x128xi1>
    %87 = vector.broadcast %cst_41 : f32 to vector<16x128xf32>
    %88 = arith.select %86, %82, %87 : vector<16x128xi1>, vector<16x128xf32>
    %89 = arith.subf %82, %88 : vector<16x128xf32>
    %cst_42 = arith.constant dense<0.000000e+00> : vector<128xf32>
    %90 = vector.multi_reduction <add>, %88, %cst_42 [0] : vector<16x128xf32> to vector<128xf32>
    %91 = vector.shape_cast %90 : vector<128xf32> to vector<1x128xf32>
    %cst_43 = arith.constant 1.250000e-01 : f32
    %92 = vector.broadcast %cst_43 : f32 to vector<1x128xf32>
    %93 = arith.mulf %91, %92 : vector<1x128xf32>
    %cst_44 = arith.constant dense<0.000000e+00> : vector<128xf32>
    %94 = vector.multi_reduction <add>, %89, %cst_44 [0] : vector<16x128xf32> to vector<128xf32>
    %95 = vector.shape_cast %94 : vector<128xf32> to vector<1x128xf32>
    %cst_45 = arith.constant 1.250000e-01 : f32
    %96 = vector.broadcast %cst_45 : f32 to vector<1x128xf32>
    %97 = arith.mulf %95, %96 : vector<1x128xf32>
    %98 = arith.mulf %88, %88 : vector<16x128xf32>
    %cst_46 = arith.constant dense<0.000000e+00> : vector<128xf32>
    %99 = vector.multi_reduction <add>, %98, %cst_46 [0] : vector<16x128xf32> to vector<128xf32>
    %100 = vector.shape_cast %99 : vector<128xf32> to vector<1x128xf32>
    %cst_47 = arith.constant 1.250000e-01 : f32
    %101 = vector.broadcast %cst_47 : f32 to vector<1x128xf32>
    %102 = arith.mulf %100, %101 : vector<1x128xf32>
    %103 = arith.mulf %89, %89 : vector<16x128xf32>
    %cst_48 = arith.constant dense<0.000000e+00> : vector<128xf32>
    %104 = vector.multi_reduction <add>, %103, %cst_48 [0] : vector<16x128xf32> to vector<128xf32>
    %105 = vector.shape_cast %104 : vector<128xf32> to vector<1x128xf32>
    %cst_49 = arith.constant 1.250000e-01 : f32
    %106 = vector.broadcast %cst_49 : f32 to vector<1x128xf32>
    %107 = arith.mulf %105, %106 : vector<1x128xf32>
    %108 = arith.mulf %93, %93 : vector<1x128xf32>
    %109 = arith.subf %102, %108 : vector<1x128xf32>
    %cst_50 = arith.constant 0.000000e+00 : f32
    %110 = vector.broadcast %cst_50 : f32 to vector<1x128xf32>
    %111 = arith.maximumf %109, %110 : vector<1x128xf32>
    %112 = arith.mulf %97, %97 : vector<1x128xf32>
    %113 = arith.subf %107, %112 : vector<1x128xf32>
    %cst_51 = arith.constant 0.000000e+00 : f32
    %114 = vector.broadcast %cst_51 : f32 to vector<1x128xf32>
    %115 = arith.maximumf %113, %114 : vector<1x128xf32>
    %116 = vector.shape_cast %9 : vector<16x1xi1> to vector<16x1xi1>
    %117 = vector.broadcast %116 : vector<16x1xi1> to vector<16x128xi1>
    %118 = vector.shape_cast %93 : vector<1x128xf32> to vector<1x128xf32>
    %119 = vector.broadcast %118 : vector<1x128xf32> to vector<16x128xf32>
    %120 = vector.shape_cast %97 : vector<1x128xf32> to vector<1x128xf32>
    %121 = vector.broadcast %120 : vector<1x128xf32> to vector<16x128xf32>
    %122 = arith.select %117, %119, %121 : vector<16x128xi1>, vector<16x128xf32>
    %123 = vector.shape_cast %9 : vector<16x1xi1> to vector<16x1xi1>
    %124 = vector.broadcast %123 : vector<16x1xi1> to vector<16x128xi1>
    %125 = vector.shape_cast %111 : vector<1x128xf32> to vector<1x128xf32>
    %126 = vector.broadcast %125 : vector<1x128xf32> to vector<16x128xf32>
    %127 = vector.shape_cast %115 : vector<1x128xf32> to vector<1x128xf32>
    %128 = vector.broadcast %127 : vector<1x128xf32> to vector<16x128xf32>
    %129 = arith.select %124, %126, %128 : vector<16x128xi1>, vector<16x128xf32>
    %130 = arith.subf %82, %122 : vector<16x128xf32>
    %cst_52 = arith.constant 9.99999974E-6 : f32
    %131 = vector.broadcast %cst_52 : f32 to vector<16x128xf32>
    %132 = arith.addf %129, %131 : vector<16x128xf32>
    %133 = math.rsqrt %132 : vector<16x128xf32>
    %134 = arith.mulf %130, %133 : vector<16x128xf32>
    %135 = vector.broadcast %83 : vector<1x128xf32> to vector<16x128xf32>
    %136 = arith.mulf %134, %135 : vector<16x128xf32>
    %137 = vector.broadcast %84 : vector<1x128xf32> to vector<16x128xf32>
    %138 = arith.addf %136, %137 : vector<16x128xf32>
    %cst_53 = arith.constant 0.000000e+00 : f32
    %139 = vector.broadcast %cst_53 : f32 to vector<16x128xf32>
    %140 = arith.maximumf %138, %139 : vector<16x128xf32>
    %c0_54 = arith.constant 0 : index
    %c0_55 = arith.constant 0 : index
    %141 = vector.load %arg13[%c0_54, %c0_55] : memref<128x128xf32, #tpu.memory_space<vmem>>, vector<128x128xf32>
    %c0_56 = arith.constant 0 : index
    %c0_57 = arith.constant 0 : index
    %142 = vector.load %arg14[%c0_56, %c0_57] : memref<1x128xf32, #tpu.memory_space<vmem>>, vector<1x128xf32>
    %cst_58 = arith.constant dense<0.000000e+00> : vector<16x128xf32>
    %143 = tpu.matmul %140, %141, %cst_58 {dimension_numbers = #tpu.dot_dimension_numbers<[1], [0], [0], [1], [0, 0, 1, 1], [], []>} : vector<16x128xf32>, vector<128x128xf32>, vector<16x128xf32> -> vector<16x128xf32>
    %144 = vector.broadcast %142 : vector<1x128xf32> to vector<16x128xf32>
    %145 = arith.addf %143, %144 : vector<16x128xf32>
    %c0_59 = arith.constant 0 : index
    %c0_60 = arith.constant 0 : index
    %146 = vector.load %arg15[%c0_59, %c0_60] : memref<16x128xf32, #tpu.memory_space<vmem>>, vector<16x128xf32>
    tpu.vector_store %arg15[%c0_59, %c0_60], %145 {strides = array<i32>} : memref<16x128xf32, #tpu.memory_space<vmem>>, vector<16x128xf32>,
    return
  }
}

</mosaic_0001>

<llo_original>
// kernel: tpu_custom_call.1
$region0: #{tpu_custom_call.1}
  #allocation0 [shape = 'u32[]', space=smem, size = 0x4, offset = 0x4, fixed_abs, tag = 'smem constant byte address 0x4 - core index']
  #allocation1 [shape = 'u32[144,128]{1,0:T(1,128)}', space=vmem, size = 0x12000, scoped, tag = 'internal scratch']
  %s0 = inlined_call_operand.hbm [shape: f32[8,128], index: 0, kind: input, shape index: {}]
  %s1 = inlined_call_operand.hbm [shape: f32[8,128], index: 1, kind: input, shape index: {}]
  %s2 = inlined_call_operand.hbm [shape: f32[8,128], index: 2, kind: input, shape index: {}]
  %s3 = inlined_call_operand.hbm [shape: f32[128,128], index: 3, kind: input, shape index: {}]
  %s4 = inlined_call_operand.vmem [shape: f32[1,128], index: 4, kind: input, shape index: {}]
  %s5 = inlined_call_operand.vmem [shape: f32[1,128], index: 5, kind: input, shape index: {}]
  %s6 = inlined_call_operand.vmem [shape: f32[1,128], index: 6, kind: input, shape index: {}]
  %s7 = inlined_call_operand.hbm [shape: f32[128,128], index: 7, kind: input, shape index: {}]
  %s8 = inlined_call_operand.vmem [shape: f32[1,128], index: 8, kind: input, shape index: {}]
  %s9 = inlined_call_operand.hbm [shape: f32[128,128], index: 9, kind: input, shape index: {}]
  %s10 = inlined_call_operand.vmem [shape: f32[1,128], index: 10, kind: input, shape index: {}]
  %s11 = inlined_call_operand.vmem [shape: f32[1,128], index: 11, kind: input, shape index: {}]
  %s12 = inlined_call_operand.vmem [shape: f32[1,128], index: 12, kind: input, shape index: {}]
  %s13 = inlined_call_operand.hbm [shape: f32[128,128], index: 13, kind: input, shape index: {}]
  %s14 = inlined_call_operand.vmem [shape: f32[1,128], index: 14, kind: input, shape index: {}]
  %s15 = inlined_call_operand.hbm [shape: f32[16,128], index: 15, kind: output, shape index: {}]
  %s16 = sld [smem:[#allocation0]]
  $region98: #{tpu_custom_call.1} parent=0
    _
  %s18 = ssub.s32 1, %s16
  %s19 = scalar_select 0, %s18, %s16
  $region1: #{tpu_custom_call.1} parent=0
    #allocation2 [shape = 'u8[4096]{0}', space=vmem, size = 0x1000, scoped, tag = 'input window, operand 0, single buffered']
    #allocation3 [shape = 's32[1]{0}', space=sflag, size = 0x4, scoped, tag = 'scoped memory for tpu_custom_call.1']
    #allocation4 [shape = 's32[1]{0}', space=sflag, size = 0x4, scoped, tag = 'scoped memory for tpu_custom_call.1']
    #allocation5 [shape = 'u8[4096]{0}', space=vmem, size = 0x1000, scoped, tag = 'input window, operand 1, single buffered']
    #allocation6 [shape = 's32[1]{0}', space=sflag, size = 0x4, scoped, tag = 'scoped memory for tpu_custom_call.1']
    #allocation7 [shape = 'u8[4096]{0}', space=vmem, size = 0x1000, scoped, tag = 'input window, operand 2, single buffered']
    #allocation8 [shape = 'u8[65536]{0}', space=vmem, size = 0x10000, scoped, tag = 'input window, operand 3, single buffered']
    #allocation9 [shape = 's32[1]{0}', space=sflag, size = 0x4, scoped, tag = 'scoped memory for tpu_custom_call.1']
    #allocation10 [shape = 'u8[65536]{0}', space=vmem, size = 0x10000, scoped, tag = 'input window, operand 7, single buffered']
    #allocation11 [shape = 'u8[65536]{0}', space=vmem, size = 0x10000, scoped, tag = 'input window, operand 9, single buffered']
    #allocation12 [shape = 's32[1]{0}', space=sflag, size = 0x4, scoped, tag = 'scoped memory for tpu_custom_call.1']
    #allocation13 [shape = 'u8[65536]{0}', space=vmem, size = 0x10000, scoped, tag = 'input window, operand 13, single buffered']
    #allocation14 [shape = 'u8[8192]{0}', space=vmem, size = 0x2000, scoped, tag = 'output window, operand 0, single buffered']
    %20 = vsyncpa [#allocation3], 0
    %21 = vsyncpa [#allocation6], 0
    %22 = vsyncpa [#allocation9], 0
    %23 = vsyncpa [#allocation12], 0
    %24 = vsyncpa [#allocation4], 0
    // Predicated region
    $region2: #{tpu_custom_call.1} parent=1 // pred_check
      _
    $region3: #{tpu_custom_call.1} parent=1 // pred_check_branch
      %26 = sbr.rel (0) target = $region5
    $region4: #{tpu_custom_call.1} parent=1 // pred_region
      %s28 = ssub.s32 128, 128
      %29 = vsyncadd [#allocation3], %s28
      %s31 = sshll.u32 [#allocation2], 4
      %s32 = int_to_ptr.vmem [resolvable:$true] %s31
      %34 = dma.hbm_to_vmem [thread:$0]  %s0, 128, %s32, [#allocation3]
    $region5: #{tpu_custom_call.1} parent=1 // pred_fallthru
      _
    // Predicated region
    $region6: #{tpu_custom_call.1} parent=1 // pred_check
      _
    $region7: #{tpu_custom_call.1} parent=1 // pred_check_branch
      %36 = sbr.rel (0) target = $region9
    $region8: #{tpu_custom_call.1} parent=1 // pred_region
      %s38 = ssub.s32 128, 128
      %39 = vsyncadd [#allocation6], %s38
      %s41 = sshll.u32 [#allocation5], 4
      %s42 = int_to_ptr.vmem [resolvable:$true] %s41
      %44 = dma.hbm_to_vmem [thread:$0]  %s1, 128, %s42, [#allocation6]
    $region9: #{tpu_custom_call.1} parent=1 // pred_fallthru
      _
    // Predicated region
    $region10: #{tpu_custom_call.1} parent=1 // pred_check
      _
    $region11: #{tpu_custom_call.1} parent=1 // pred_check_branch
      %46 = sbr.rel (0) target = $region13
    $region12: #{tpu_custom_call.1} parent=1 // pred_region
      %s48 = ssub.s32 128, 128
      %49 = vsyncadd [#allocation6], %s48
      %s51 = sshll.u32 [#allocation7], 4
      %s52 = int_to_ptr.vmem [resolvable:$true] %s51
      %54 = dma.hbm_to_vmem [thread:$0]  %s2, 128, %s52, [#allocation6]
    $region13: #{tpu_custom_call.1} parent=1 // pred_fallthru
      _
    // Predicated region
    $region14: #{tpu_custom_call.1} parent=1 // pred_check
      _
    $region15: #{tpu_custom_call.1} parent=1 // pred_check_branch
      %56 = sbr.rel (0) target = $region17
    $region16: #{tpu_custom_call.1} parent=1 // pred_region
      %s58 = ssub.s32 2048, 2048
      %59 = vsyncadd [#allocation9], %s58
      %s60 = sshll.u32 [#allocation8], 4
      %s61 = int_to_ptr.vmem [resolvable:$true] %s60
      %66 = dma.hbm_to_vmem [thread:$0]  %s3, 2048, %s61, [#allocation9], 128, 128, 8
    $region17: #{tpu_custom_call.1} parent=1 // pred_fallthru
      _
    // Predicated region
    $region18: #{tpu_custom_call.1} parent=1 // pred_check
      _
    $region19: #{tpu_custom_call.1} parent=1 // pred_check_branch
      %68 = sbr.rel (0) target = $region21
    $region20: #{tpu_custom_call.1} parent=1 // pred_region
      _
    $region21: #{tpu_custom_call.1} parent=1 // pred_fallthru
      _
    // Predicated region
    $region22: #{tpu_custom_call.1} parent=1 // pred_check
      _
    $region23: #{tpu_custom_call.1} parent=1 // pred_check_branch
      %70 = sbr.rel (0) target = $region25
    $region24: #{tpu_custom_call.1} parent=1 // pred_region
      _
    $region25: #{tpu_custom_call.1} parent=1 // pred_fallthru
      _
    // Predicated region
    $region26: #{tpu_custom_call.1} parent=1 // pred_check
      _
    $region27: #{tpu_custom_call.1} parent=1 // pred_check_branch
      %72 = sbr.rel (0) target = $region29
    $region28: #{tpu_custom_call.1} parent=1 // pred_region
      _
    $region29: #{tpu_custom_call.1} parent=1 // pred_fallthru
      _
    // Predicated region
    $region30: #{tpu_custom_call.1} parent=1 // pred_check
      _
    $region31: #{tpu_custom_call.1} parent=1 // pred_check_branch
      %74 = sbr.rel (0) target = $region33
    $region32: #{tpu_custom_call.1} parent=1 // pred_region
      %s76 = ssub.s32 2048, 2048
      %77 = vsyncadd [#allocation9], %s76
      %s78 = sshll.u32 [#allocation10], 4
      %s79 = int_to_ptr.vmem [resolvable:$true] %s78
      %84 = dma.hbm_to_vmem [thread:$0]  %s7, 2048, %s79, [#allocation9], 128, 128, 8
    $region33: #{tpu_custom_call.1} parent=1 // pred_fallthru
      _
    // Predicated region
    $region34: #{tpu_custom_call.1} parent=1 // pred_check
      _
    $region35: #{tpu_custom_call.1} parent=1 // pred_check_branch
      %86 = sbr.rel (0) target = $region37
    $region36: #{tpu_custom_call.1} parent=1 // pred_region
      _
    $region37: #{tpu_custom_call.1} parent=1 // pred_fallthru
      _
    // Predicated region
    $region38: #{tpu_custom_call.1} parent=1 // pred_check
      _
    $region39: #{tpu_custom_call.1} parent=1 // pred_check_branch
      %88 = sbr.rel (0) target = $region41
    $region40: #{tpu_custom_call.1} parent=1 // pred_region
      %s90 = ssub.s32 2048, 2048
      %91 = vsyncadd [#allocation12], %s90
      %s92 = sshll.u32 [#allocation11], 4
      %s93 = int_to_ptr.vmem [resolvable:$true] %s92
      %98 = dma.hbm_to_vmem [thread:$0]  %s9, 2048, %s93, [#allocation12], 128, 128, 8
    $region41: #{tpu_custom_call.1} parent=1 // pred_fallthru
      _
    // Predicated region
    $region42: #{tpu_custom_call.1} parent=1 // pred_check
      _
    $region43: #{tpu_custom_call.1} parent=1 // pred_check_branch
      %100 = sbr.rel (0) target = $region45
    $region44: #{tpu_custom_call.1} parent=1 // pred_region
      _
    $region45: #{tpu_custom_call.1} parent=1 // pred_fallthru
      _
    // Predicated region
    $region46: #{tpu_custom_call.1} parent=1 // pred_check
      _
    $region47: #{tpu_custom_call.1} parent=1 // pred_check_branch
      %102 = sbr.rel (0) target = $region49
    $region48: #{tpu_custom_call.1} parent=1 // pred_region
      _
    $region49: #{tpu_custom_call.1} parent=1 // pred_fallthru
      _
    // Predicated region
    $region50: #{tpu_custom_call.1} parent=1 // pred_check
      _
    $region51: #{tpu_custom_call.1} parent=1 // pred_check_branch
      %104 = sbr.rel (0) target = $region53
    $region52: #{tpu_custom_call.1} parent=1 // pred_region
      _
    $region53: #{tpu_custom_call.1} parent=1 // pred_fallthru
      _
    // Predicated region
    $region54: #{tpu_custom_call.1} parent=1 // pred_check
      _
    $region55: #{tpu_custom_call.1} parent=1 // pred_check_branch
      %106 = sbr.rel (0) target = $region57
    $region56: #{tpu_custom_call.1} parent=1 // pred_region
      %s108 = ssub.s32 2048, 2048
      %109 = vsyncadd [#allocation12], %s108
      %s110 = sshll.u32 [#allocation13], 4
      %s111 = int_to_ptr.vmem [resolvable:$true] %s110
      %116 = dma.hbm_to_vmem [thread:$0]  %s13, 2048, %s111, [#allocation12], 128, 128, 8
    $region57: #{tpu_custom_call.1} parent=1 // pred_fallthru
      _
    // Predicated region
    $region58: #{tpu_custom_call.1} parent=1 // pred_check
      _
    $region59: #{tpu_custom_call.1} parent=1 // pred_check_branch
      %118 = sbr.rel (0) target = $region61
    $region60: #{tpu_custom_call.1} parent=1 // pred_region
      _
    $region61: #{tpu_custom_call.1} parent=1 // pred_fallthru
      _
    // Predicated region
    $region62: #{tpu_custom_call.1} parent=1 // pred_check
      _
    $region63: #{tpu_custom_call.1} parent=1 // pred_check_branch
      %120 = sbr.rel (0) target = $region65
    $region64: #{tpu_custom_call.1} parent=1 // pred_region
      %121 = dma.done [#allocation3], 128
    $region65: #{tpu_custom_call.1} parent=1 // pred_fallthru
      _
    // Predicated region
    $region66: #{tpu_custom_call.1} parent=1 // pred_check
      _
    $region67: #{tpu_custom_call.1} parent=1 // pred_check_branch
      %123 = sbr.rel (0) target = $region69
    $region68: #{tpu_custom_call.1} parent=1 // pred_region
      %124 = dma.done [#allocation6], 128
    $region69: #{tpu_custom_call.1} parent=1 // pred_fallthru
      _
    // Predicated region
    $region70: #{tpu_custom_call.1} parent=1 // pred_check
      _
    $region71: #{tpu_custom_call.1} parent=1 // pred_check_branch
      %126 = sbr.rel (0) target = $region73
    $region72: #{tpu_custom_call.1} parent=1 // pred_region
      %127 = dma.done [#allocation6], 128
    $region73: #{tpu_custom_call.1} parent=1 // pred_fallthru
      _
    // Predicated region
    $region74: #{tpu_custom_call.1} parent=1 // pred_check
      _
    $region75: #{tpu_custom_call.1} parent=1 // pred_check_branch
      %129 = sbr.rel (0) target = $region77
    $region76: #{tpu_custom_call.1} parent=1 // pred_region
      %130 = dma.done [#allocation9], 2048
    $region77: #{tpu_custom_call.1} parent=1 // pred_fallthru
      _
    // Predicated region
    $region78: #{tpu_custom_call.1} parent=1 // pred_check
      _
    $region79: #{tpu_custom_call.1} parent=1 // pred_check_branch
      %132 = sbr.rel (0) target = $region81
    $region80: #{tpu_custom_call.1} parent=1 // pred_region
      %133 = dma.done [#allocation9], 2048
    $region81: #{tpu_custom_call.1} parent=1 // pred_fallthru
      _
    // Predicated region
    $region82: #{tpu_custom_call.1} parent=1 // pred_check
      _
    $region83: #{tpu_custom_call.1} parent=1 // pred_check_branch
      %135 = sbr.rel (0) target = $region85
    $region84: #{tpu_custom_call.1} parent=1 // pred_region
      %136 = dma.done [#allocation12], 2048
    $region85: #{tpu_custom_call.1} parent=1 // pred_fallthru
      _
    // Predicated region
    $region86: #{tpu_custom_call.1} parent=1 // pred_check
      _
    $region87: #{tpu_custom_call.1} parent=1 // pred_check_branch
      %138 = sbr.rel (0) target = $region89
    $region88: #{tpu_custom_call.1} parent=1 // pred_region
      %139 = dma.done [#allocation12], 2048
    $region89: #{tpu_custom_call.1} parent=1 // pred_fallthru
      _
    %v140 = vld [vmem:[#allocation2] sm:$0xff]
    %v141 = vld [vmem:[#allocation5] sm:$0xff]
    %vm142 = vcmp.gt.f32.partialorder %v141, 0.6
    %v143 = vld [vmem:[#allocation7] sm:$0xff]
    %v144 = vsel %vm142, %v143, %v140
    %v145 = vlaneseq
    %v146 = vshrl.u32 %v145, 7
    %v147 = vadd.s32 %v146, 8
    %vm148 = vcmp.lt.s32.totalorder %v146, 8
    %vm149 = vcmp.lt.s32.totalorder %v147, 8
    %v150 = vld [vmem:[#allocation8] sm:$0xff]
    %v151 = vld [vmem:[#allocation8 + $0x8] sm:$0xff]
    %v152 = vld [vmem:[#allocation8 + $0x10] sm:$0xff]
    %v153 = vld [vmem:[#allocation8 + $0x18] sm:$0xff]
    %v154 = vld [vmem:[#allocation8 + $0x20] sm:$0xff]
    %v155 = vld [vmem:[#allocation8 + $0x28] sm:$0xff]
    %v156 = vld [vmem:[#allocation8 + $0x30] sm:$0xff]
    %v157 = vld [vmem:[#allocation8 + $0x38] sm:$0xff]
    %v158 = vld [vmem:[#allocation8 + $0x40] sm:$0xff]
    %v159 = vld [vmem:[#allocation8 + $0x48] sm:$0xff]
    %v160 = vld [vmem:[#allocation8 + $0x50] sm:$0xff]
    %v161 = vld [vmem:[#allocation8 + $0x58] sm:$0xff]
    %v162 = vld [vmem:[#allocation8 + $0x60] sm:$0xff]
    %v163 = vld [vmem:[#allocation8 + $0x68] sm:$0xff]
    %v164 = vld [vmem:[#allocation8 + $0x70] sm:$0xff]
    %v165 = vld [vmem:[#allocation8 + $0x78] sm:$0xff]
    %v166 = vld [vmem:[%s4] sm:$0x1]
    %v168 = vlaneseq
    %v169 = vshrl.u32 %v168, 7
    %v170 = vsub.s32 0, %v169
    %v171 = vrot.slane %v166, %v170
    %173 = vmatprep.subr.mxu0 0.0
    %174 = vmatpush1.msra.mxu0 %v150
    %175 = vmatprep.subr.mxu0 0.0
    %176 = vmatpush1.msra.mxu0 %v151
    %177 = vmatprep.subr.mxu0 0.0
    %178 = vmatpush1.msra.mxu0 %v152
    %179 = vmatprep.subr.mxu0 0.0
    %180 = vmatpush1.msra.mxu0 %v153
    %181 = vmatprep.subr.mxu0 0.0
    %182 = vmatpush1.msra.mxu0 %v154
    %183 = vmatprep.subr.mxu0 0.0
    %184 = vmatpush1.msra.mxu0 %v155
    %185 = vmatprep.subr.mxu0 0.0
    %186 = vmatpush1.msra.mxu0 %v156
    %187 = vmatprep.subr.mxu0 0.0
    %188 = vmatpush1.msra.mxu0 %v157
    %189 = vmatprep.subr.mxu0 0.0
    %190 = vmatpush1.msra.mxu0 %v158
    %191 = vmatprep.subr.mxu0 0.0
    %192 = vmatpush1.msra.mxu0 %v159
    %193 = vmatprep.subr.mxu0 0.0
    %194 = vmatpush1.msra.mxu0 %v160
    %195 = vmatprep.subr.mxu0 0.0
    %196 = vmatpush1.msra.mxu0 %v161
    %197 = vmatprep.subr.mxu0 0.0
    %198 = vmatpush1.msra.mxu0 %v162
    %199 = vmatprep.subr.mxu0 0.0
    %200 = vmatpush1.msra.mxu0 %v163
    %201 = vmatprep.subr.mxu0 0.0
    %202 = vmatpush1.msra.mxu0 %v164
    %203 = vmatprep.subr.mxu0 0.0
    %204 = vmatpush1.msra.mxu0 %v165
    %205 = vmatprep.subr.mxu0 0.0
    %206 = vmatpush1.msra.mxu0 0.0
    %207 = vmatprep.subr.mxu0 0.0
    %208 = vmatpush1.msra.mxu0 0.0
    %209 = vmatprep.subr.mxu0 0.0
    %210 = vmatpush1.msra.mxu0 0.0
    %211 = vmatprep.subr.mxu0 0.0
    %212 = vmatpush1.msra.mxu0 0.0
    %213 = vmatprep.subr.mxu0 0.0
    %214 = vmatpush1.msra.mxu0 0.0
    %215 = vmatprep.subr.mxu0 0.0
    %216 = vmatpush1.msra.mxu0 0.0
    %217 = vmatprep.subr.mxu0 0.0
    %218 = vmatpush1.msra.mxu0 0.0
    %219 = vmatprep.subr.mxu0 0.0
    %220 = vmatpush1.msra.mxu0 0.0
    %221 = vmatprep.subr.mxu0 0.0
    %222 = vmatpush1.msra.mxu0 0.0
    %223 = vmatprep.subr.mxu0 0.0
    %224 = vmatpush1.msra.mxu0 0.0
    %225 = vmatprep.subr.mxu0 0.0
    %226 = vmatpush1.msra.mxu0 0.0
    %227 = vmatprep.subr.mxu0 0.0
    %228 = vmatpush1.msra.mxu0 0.0
    %229 = vmatprep.subr.mxu0 0.0
    %230 = vmatpush1.msra.mxu0 0.0
    %231 = vmatprep.subr.mxu0 0.0
    %232 = vmatpush1.msra.mxu0 0.0
    %233 = vmatprep.subr.mxu0 0.0
    %234 = vmatpush1.msra.mxu0 0.0
    %235 = vmatprep.subr.mxu0 0.0
    %236 = vmatpush1.msra.mxu0 0.0
    %237 = vmatprep.mubr.f32.mxu0 0.0
    %238 = vmatmul.mubr.f32.gmra.mrb[0].mxu0 %v140
    %v239 = vpop.f32.mrb[0].mxu0
    %v240 = vadd.f32 %v171, %v239
    %v241 = vpop.f32.mrb[0].mxu0
    %242 = vmatprep.mubr.f32.mxu0 0.0
    %243 = vmatmul.mubr.f32.gmra.mrb[0].mxu0 %v144
    %v244 = vpop.f32.mrb[0].mxu0
    %v245 = vadd.f32 %v171, %v244
    %v246 = vpop.f32.mrb[0].mxu0
    %247 = vdwg.mxu0
    %v248 = vld [vmem:[%s5] sm:$0x1]
    %v249 = vld [vmem:[%s6] sm:$0x1]
    %v250 = vsel %vm148, 1, 0
    %v251 = vsel %vm149, 1, 0
    %vm252 = vcmp.eq.s32.totalorder %v250, 1
    %vm253 = vcmp.eq.s32.totalorder %v251, 1
    %v254 = vsel %vm252, %v240, 0.0
    %v255 = vsel %vm253, %v245, 0.0
    %v256 = vsub.f32 %v240, %v254
    %v257 = vsub.f32 %v245, %v255
    %v258 = vadd.f32 %v254, %v255
    %v259 = vrot.slane %v258, 4
    %v260 = vadd.f32 %v258, %v259
    %v261 = vrot.slane %v260, 2
    %v262 = vadd.f32 %v260, %v261
    %v263 = vrot.slane %v262, 1
    %v264 = vadd.f32 %v262, %v263
    %v265 = vmul.f32 %v264, 0.125
    %v266 = vadd.f32 %v256, %v257
    %v267 = vrot.slane %v266, 4
    %v268 = vadd.f32 %v266, %v267
    %v269 = vrot.slane %v268, 2
    %v270 = vadd.f32 %v268, %v269
    %v271 = vrot.slane %v270, 1
    %v272 = vadd.f32 %v270, %v271
    %v273 = vmul.f32 %v272, 0.125
    %v274 = vmul.f32 %v254, %v254
    %v275 = vmul.f32 %v255, %v255
    %v276 = vadd.f32 %v274, %v275
    %v277 = vrot.slane %v276, 4
    %v278 = vadd.f32 %v276, %v277
    %v279 = vrot.slane %v278, 2
    %v280 = vadd.f32 %v278, %v279
    %v281 = vrot.slane %v280, 1
    %v282 = vadd.f32 %v280, %v281
    %v283 = vmul.f32 %v282, 0.125
    %v284 = vmul.f32 %v256, %v256
    %v285 = vmul.f32 %v257, %v257
    %v286 = vadd.f32 %v284, %v285
    %v287 = vrot.slane %v286, 4
    %v288 = vadd.f32 %v286, %v287
    %v289 = vrot.slane %v288, 2
    %v290 = vadd.f32 %v288, %v289
    %v291 = vrot.slane %v290, 1
    %v292 = vadd.f32 %v290, %v291
    %v293 = vmul.f32 %v292, 0.125
    %v294 = vmul.f32 %v265, %v265
    %v295 = vsub.f32 %v283, %v294
    %v296 = vmax.f32 %v295, 0.0
    %v297 = vmul.f32 %v273, %v273
    %v298 = vsub.f32 %v293, %v297
    %v299 = vmax.f32 %v298, 0.0
    %v300 = vsel %vm252, %v265, %v273
    %v301 = vsel %vm253, %v265, %v273
    %v302 = vsel %vm252, %v296, %v299
    %v303 = vsel %vm253, %v296, %v299
    %v304 = vsub.f32 %v240, %v300
    %v305 = vsub.f32 %v245, %v301
    %v306 = vadd.f32 %v302, 1e-05
    %v307 = vadd.f32 %v303, 1e-05
    %v308 = vrsqrt.pop %v306
    %v309 = vrsqrt.pop %v307
    %v310 = vmul.f32 %v304, %v308
    %v311 = vmul.f32 %v305, %v309
    %v313 = vlaneseq
    %v314 = vshrl.u32 %v313, 7
    %v315 = vsub.s32 0, %v314
    %v316 = vrot.slane %v248, %v315
    %v318 = vmul.f32 %v310, %v316
    %v319 = vmul.f32 %v311, %v316
    %v321 = vlaneseq
    %v322 = vshrl.u32 %v321, 7
    %v323 = vsub.s32 0, %v322
    %v324 = vrot.slane %v249, %v323
    %v326 = vadd.f32 %v318, %v324
    %v327 = vadd.f32 %v319, %v324
    %v328 = vmax.f32 %v326, 0.0
    %v329 = vmax.f32 %v327, 0.0
    %v330 = vld [vmem:[#allocation10] sm:$0xff]
    %v331 = vld [vmem:[#allocation10 + $0x8] sm:$0xff]
    %v332 = vld [vmem:[#allocation10 + $0x10] sm:$0xff]
    %v333 = vld [vmem:[#allocation10 + $0x18] sm:$0xff]
    %v334 = vld [vmem:[#allocation10 + $0x20] sm:$0xff]
    %v335 = vld [vmem:[#allocation10 + $0x28] sm:$0xff]
    %v336 = vld [vmem:[#allocation10 + $0x30] sm:$0xff]
    %v337 = vld [vmem:[#allocation10 + $0x38] sm:$0xff]
    %v338 = vld [vmem:[#allocation10 + $0x40] sm:$0xff]
    %v339 = vld [vmem:[#allocation10 + $0x48] sm:$0xff]
    %v340 = vld [vmem:[#allocation10 + $0x50] sm:$0xff]
    %v341 = vld [vmem:[#allocation10 + $0x58] sm:$0xff]
    %v342 = vld [vmem:[#allocation10 + $0x60] sm:$0xff]
    %v343 = vld [vmem:[#allocation10 + $0x68] sm:$0xff]
    %v344 = vld [vmem:[#allocation10 + $0x70] sm:$0xff]
    %v345 = vld [vmem:[#allocation10 + $0x78] sm:$0xff]
    %v346 = vld [vmem:[%s8] sm:$0x1]
    %v348 = vlaneseq
    %v349 = vshrl.u32 %v348, 7
    %v350 = vsub.s32 0, %v349
    %v351 = vrot.slane %v346, %v350
    %353 = vmatprep.subr.mxu0 0.0
    %354 = vmatpush1.msra.mxu0 %v330
    %355 = vmatprep.subr.mxu0 0.0
    %356 = vmatpush1.msra.mxu0 %v331
    %357 = vmatprep.subr.mxu0 0.0
    %358 = vmatpush1.msra.mxu0 %v332
    %359 = vmatprep.subr.mxu0 0.0
    %360 = vmatpush1.msra.mxu0 %v333
    %361 = vmatprep.subr.mxu0 0.0
    %362 = vmatpush1.msra.mxu0 %v334
    %363 = vmatprep.subr.mxu0 0.0
    %364 = vmatpush1.msra.mxu0 %v335
    %365 = vmatprep.subr.mxu0 0.0
    %366 = vmatpush1.msra.mxu0 %v336
    %367 = vmatprep.subr.mxu0 0.0
    %368 = vmatpush1.msra.mxu0 %v337
    %369 = vmatprep.subr.mxu0 0.0
    %370 = vmatpush1.msra.mxu0 %v338
    %371 = vmatprep.subr.mxu0 0.0
    %372 = vmatpush1.msra.mxu0 %v339
    %373 = vmatprep.subr.mxu0 0.0
    %374 = vmatpush1.msra.mxu0 %v340
    %375 = vmatprep.subr.mxu0 0.0
    %376 = vmatpush1.msra.mxu0 %v341
    %377 = vmatprep.subr.mxu0 0.0
    %378 = vmatpush1.msra.mxu0 %v342
    %379 = vmatprep.subr.mxu0 0.0
    %380 = vmatpush1.msra.mxu0 %v343
    %381 = vmatprep.subr.mxu0 0.0
    %382 = vmatpush1.msra.mxu0 %v344
    %383 = vmatprep.subr.mxu0 0.0
    %384 = vmatpush1.msra.mxu0 %v345
    %385 = vmatprep.subr.mxu0 0.0
    %386 = vmatpush1.msra.mxu0 0.0
    %387 = vmatprep.subr.mxu0 0.0
    %388 = vmatpush1.msra.mxu0 0.0
    %389 = vmatprep.subr.mxu0 0.0
    %390 = vmatpush1.msra.mxu0 0.0
    %391 = vmatprep.subr.mxu0 0.0
    %392 = vmatpush1.msra.mxu0 0.0
    %393 = vmatprep.subr.mxu0 0.0
    %394 = vmatpush1.msra.mxu0 0.0
    %395 = vmatprep.subr.mxu0 0.0
    %396 = vmatpush1.msra.mxu0 0.0
    %397 = vmatprep.subr.mxu0 0.0
    %398 = vmatpush1.msra.mxu0 0.0
    %399 = vmatprep.subr.mxu0 0.0
    %400 = vmatpush1.msra.mxu0 0.0
    %401 = vmatprep.subr.mxu0 0.0
    %402 = vmatpush1.msra.mxu0 0.0
    %403 = vmatprep.subr.mxu0 0.0
    %404 = vmatpush1.msra.mxu0 0.0
    %405 = vmatprep.subr.mxu0 0.0
    %406 = vmatpush1.msra.mxu0 0.0
    %407 = vmatprep.subr.mxu0 0.0
    %408 = vmatpush1.msra.mxu0 0.0
    %409 = vmatprep.subr.mxu0 0.0
    %410 = vmatpush1.msra.mxu0 0.0
    %411 = vmatprep.subr.mxu0 0.0
    %412 = vmatpush1.msra.mxu0 0.0
    %413 = vmatprep.subr.mxu0 0.0
    %414 = vmatpush1.msra.mxu0 0.0
    %415 = vmatprep.subr.mxu0 0.0
    %416 = vmatpush1.msra.mxu0 0.0
    %417 = vmatprep.mubr.f32.mxu0 0.0
    %418 = vmatmul.mubr.f32.gmra.mrb[0].mxu0 %v328
    %v419 = vpop.f32.mrb[0].mxu0
    %v420 = vadd.f32 %v351, %v419
    %v421 = vpop.f32.mrb[0].mxu0
    %422 = vmatprep.mubr.f32.mxu0 0.0
    %423 = vmatmul.mubr.f32.gmra.mrb[0].mxu0 %v329
    %v424 = vpop.f32.mrb[0].mxu0
    %v425 = vadd.f32 %v351, %v424
    %v426 = vpop.f32.mrb[0].mxu0
    %427 = vdwg.mxu0
    %v428 = vld [vmem:[#allocation11] sm:$0xff]
    %v429 = vld [vmem:[#allocation11 + $0x8] sm:$0xff]
    %v430 = vld [vmem:[#allocation11 + $0x10] sm:$0xff]
    %v431 = vld [vmem:[#allocation11 + $0x18] sm:$0xff]
    %v432 = vld [vmem:[#allocation11 + $0x20] sm:$0xff]
    %v433 = vld [vmem:[#allocation11 + $0x28] sm:$0xff]
    %v434 = vld [vmem:[#allocation11 + $0x30] sm:$0xff]
    %v435 = vld [vmem:[#allocation11 + $0x38] sm:$0xff]
    %v436 = vld [vmem:[#allocation11 + $0x40] sm:$0xff]
    %v437 = vld [vmem:[#allocation11 + $0x48] sm:$0xff]
    %v438 = vld [vmem:[#allocation11 + $0x50] sm:$0xff]
    %v439 = vld [vmem:[#allocation11 + $0x58] sm:$0xff]
    %v440 = vld [vmem:[#allocation11 + $0x60] sm:$0xff]
    %v441 = vld [vmem:[#allocation11 + $0x68] sm:$0xff]
    %v442 = vld [vmem:[#allocation11 + $0x70] sm:$0xff]
    %v443 = vld [vmem:[#allocation11 + $0x78] sm:$0xff]
    %v444 = vld [vmem:[%s10] sm:$0x1]
    %v446 = vlaneseq
    %v447 = vshrl.u32 %v446, 7
    %v448 = vsub.s32 0, %v447
    %v449 = vrot.slane %v444, %v448
    %451 = vmatprep.subr.mxu0 0.0
    %452 = vmatpush1.msra.mxu0 %v428
    %453 = vmatprep.subr.mxu0 0.0
    %454 = vmatpush1.msra.mxu0 %v429
    %455 = vmatprep.subr.mxu0 0.0
    %456 = vmatpush1.msra.mxu0 %v430
    %457 = vmatprep.subr.mxu0 0.0
    %458 = vmatpush1.msra.mxu0 %v431
    %459 = vmatprep.subr.mxu0 0.0
    %460 = vmatpush1.msra.mxu0 %v432
    %461 = vmatprep.subr.mxu0 0.0
    %462 = vmatpush1.msra.mxu0 %v433
    %463 = vmatprep.subr.mxu0 0.0
    %464 = vmatpush1.msra.mxu0 %v434
    %465 = vmatprep.subr.mxu0 0.0
    %466 = vmatpush1.msra.mxu0 %v435
    %467 = vmatprep.subr.mxu0 0.0
    %468 = vmatpush1.msra.mxu0 %v436
    %469 = vmatprep.subr.mxu0 0.0
    %470 = vmatpush1.msra.mxu0 %v437
    %471 = vmatprep.subr.mxu0 0.0
    %472 = vmatpush1.msra.mxu0 %v438
    %473 = vmatprep.subr.mxu0 0.0
    %474 = vmatpush1.msra.mxu0 %v439
    %475 = vmatprep.subr.mxu0 0.0
    %476 = vmatpush1.msra.mxu0 %v440
    %477 = vmatprep.subr.mxu0 0.0
    %478 = vmatpush1.msra.mxu0 %v441
    %479 = vmatprep.subr.mxu0 0.0
    %480 = vmatpush1.msra.mxu0 %v442
    %481 = vmatprep.subr.mxu0 0.0
    %482 = vmatpush1.msra.mxu0 %v443
    %483 = vmatprep.subr.mxu0 0.0
    %484 = vmatpush1.msra.mxu0 0.0
    %485 = vmatprep.subr.mxu0 0.0
    %486 = vmatpush1.msra.mxu0 0.0
    %487 = vmatprep.subr.mxu0 0.0
    %488 = vmatpush1.msra.mxu0 0.0
    %489 = vmatprep.subr.mxu0 0.0
    %490 = vmatpush1.msra.mxu0 0.0
    %491 = vmatprep.subr.mxu0 0.0
    %492 = vmatpush1.msra.mxu0 0.0
    %493 = vmatprep.subr.mxu0 0.0
    %494 = vmatpush1.msra.mxu0 0.0
    %495 = vmatprep.subr.mxu0 0.0
    %496 = vmatpush1.msra.mxu0 0.0
    %497 = vmatprep.subr.mxu0 0.0
    %498 = vmatpush1.msra.mxu0 0.0
    %499 = vmatprep.subr.mxu0 0.0
    %500 = vmatpush1.msra.mxu0 0.0
    %501 = vmatprep.subr.mxu0 0.0
    %502 = vmatpush1.msra.mxu0 0.0
    %503 = vmatprep.subr.mxu0 0.0
    %504 = vmatpush1.msra.mxu0 0.0
    %505 = vmatprep.subr.mxu0 0.0
    %506 = vmatpush1.msra.mxu0 0.0
    %507 = vmatprep.subr.mxu0 0.0
    %508 = vmatpush1.msra.mxu0 0.0
    %509 = vmatprep.subr.mxu0 0.0
    %510 = vmatpush1.msra.mxu0 0.0
    %511 = vmatprep.subr.mxu0 0.0
    %512 = vmatpush1.msra.mxu0 0.0
    %513 = vmatprep.subr.mxu0 0.0
    %514 = vmatpush1.msra.mxu0 0.0
    %515 = vmatprep.mubr.f32.mxu0 0.0
    %516 = vmatmul.mubr.f32.gmra.mrb[0].mxu0 %v420
    %v517 = vpop.f32.mrb[0].mxu0
    %v518 = vadd.f32 %v449, %v517
    %v519 = vpop.f32.mrb[0].mxu0
    %520 = vmatprep.mubr.f32.mxu0 0.0
    %521 = vmatmul.mubr.f32.gmra.mrb[0].mxu0 %v425
    %v522 = vpop.f32.mrb[0].mxu0
    %v523 = vadd.f32 %v449, %v522
    %v524 = vpop.f32.mrb[0].mxu0
    %525 = vdwg.mxu0
    %v526 = vld [vmem:[%s11] sm:$0x1]
    %v527 = vld [vmem:[%s12] sm:$0x1]
    %v528 = vsel %vm252, %v518, 0.0
    %v529 = vsel %vm253, %v523, 0.0
    %v530 = vsub.f32 %v518, %v528
    %v531 = vsub.f32 %v523, %v529
    %v532 = vadd.f32 %v528, %v529
    %v533 = vrot.slane %v532, 4
    %v534 = vadd.f32 %v532, %v533
    %v535 = vrot.slane %v534, 2
    %v536 = vadd.f32 %v534, %v535
    %v537 = vrot.slane %v536, 1
    %v538 = vadd.f32 %v536, %v537
    %v539 = vmul.f32 %v538, 0.125
    %v540 = vadd.f32 %v530, %v531
    %v541 = vrot.slane %v540, 4
    %v542 = vadd.f32 %v540, %v541
    %v543 = vrot.slane %v542, 2
    %v544 = vadd.f32 %v542, %v543
    %v545 = vrot.slane %v544, 1
    %v546 = vadd.f32 %v544, %v545
    %v547 = vmul.f32 %v546, 0.125
    %v548 = vmul.f32 %v528, %v528
    %v549 = vmul.f32 %v529, %v529
    %v550 = vadd.f32 %v548, %v549
    %v551 = vrot.slane %v550, 4
    %v552 = vadd.f32 %v550, %v551
    %v553 = vrot.slane %v552, 2
    %v554 = vadd.f32 %v552, %v553
    %v555 = vrot.slane %v554, 1
    %v556 = vadd.f32 %v554, %v555
    %v557 = vmul.f32 %v556, 0.125
    %v558 = vmul.f32 %v530, %v530
    %v559 = vmul.f32 %v531, %v531
    %v560 = vadd.f32 %v558, %v559
    %v561 = vrot.slane %v560, 4
    %v562 = vadd.f32 %v560, %v561
    %v563 = vrot.slane %v562, 2
    %v564 = vadd.f32 %v562, %v563
    %v565 = vrot.slane %v564, 1
    %v566 = vadd.f32 %v564, %v565
    %v567 = vmul.f32 %v566, 0.125
    %v568 = vmul.f32 %v539, %v539
    %v569 = vsub.f32 %v557, %v568
    %v570 = vmax.f32 %v569, 0.0
    %v571 = vmul.f32 %v547, %v547
    %v572 = vsub.f32 %v567, %v571
    %v573 = vmax.f32 %v572, 0.0
    %v574 = vsel %vm252, %v539, %v547
    %v575 = vsel %vm253, %v539, %v547
    %v576 = vsel %vm252, %v570, %v573
    %v577 = vsel %vm253, %v570, %v573
    %v578 = vsub.f32 %v518, %v574
    %v579 = vsub.f32 %v523, %v575
    %v580 = vadd.f32 %v576, 1e-05
    %v581 = vadd.f32 %v577, 1e-05
    %v582 = vrsqrt.pop %v580
    %v583 = vrsqrt.pop %v581
    %v584 = vmul.f32 %v578, %v582
    %v585 = vmul.f32 %v579, %v583
    %v587 = vlaneseq
    %v588 = vshrl.u32 %v587, 7
    %v589 = vsub.s32 0, %v588
    %v590 = vrot.slane %v526, %v589
    %v592 = vmul.f32 %v584, %v590
    %v593 = vmul.f32 %v585, %v590
    %v595 = vlaneseq
    %v596 = vshrl.u32 %v595, 7
    %v597 = vsub.s32 0, %v596
    %v598 = vrot.slane %v527, %v597
    %v600 = vadd.f32 %v592, %v598
    %v601 = vadd.f32 %v593, %v598
    %v602 = vmax.f32 %v600, 0.0
    %v603 = vmax.f32 %v601, 0.0
    %v604 = vld [vmem:[#allocation13] sm:$0xff]
    %v605 = vld [vmem:[#allocation13 + $0x8] sm:$0xff]
    %v606 = vld [vmem:[#allocation13 + $0x10] sm:$0xff]
    %v607 = vld [vmem:[#allocation13 + $0x18] sm:$0xff]
    %v608 = vld [vmem:[#allocation13 + $0x20] sm:$0xff]
    %v609 = vld [vmem:[#allocation13 + $0x28] sm:$0xff]
    %v610 = vld [vmem:[#allocation13 + $0x30] sm:$0xff]
    %v611 = vld [vmem:[#allocation13 + $0x38] sm:$0xff]
    %v612 = vld [vmem:[#allocation13 + $0x40] sm:$0xff]
    %v613 = vld [vmem:[#allocation13 + $0x48] sm:$0xff]
    %v614 = vld [vmem:[#allocation13 + $0x50] sm:$0xff]
    %v615 = vld [vmem:[#allocation13 + $0x58] sm:$0xff]
    %v616 = vld [vmem:[#allocation13 + $0x60] sm:$0xff]
    %v617 = vld [vmem:[#allocation13 + $0x68] sm:$0xff]
    %v618 = vld [vmem:[#allocation13 + $0x70] sm:$0xff]
    %v619 = vld [vmem:[#allocation13 + $0x78] sm:$0xff]
    %v620 = vld [vmem:[%s14] sm:$0x1]
    %v622 = vlaneseq
    %v623 = vshrl.u32 %v622, 7
    %v624 = vsub.s32 0, %v623
    %v625 = vrot.slane %v620, %v624
    %627 = vmatprep.subr.mxu0 0.0
    %628 = vmatpush1.msra.mxu0 %v604
    %629 = vmatprep.subr.mxu0 0.0
    %630 = vmatpush1.msra.mxu0 %v605
    %631 = vmatprep.subr.mxu0 0.0
    %632 = vmatpush1.msra.mxu0 %v606
    %633 = vmatprep.subr.mxu0 0.0
    %634 = vmatpush1.msra.mxu0 %v607
    %635 = vmatprep.subr.mxu0 0.0
    %636 = vmatpush1.msra.mxu0 %v608
    %637 = vmatprep.subr.mxu0 0.0
    %638 = vmatpush1.msra.mxu0 %v609
    %639 = vmatprep.subr.mxu0 0.0
    %640 = vmatpush1.msra.mxu0 %v610
    %641 = vmatprep.subr.mxu0 0.0
    %642 = vmatpush1.msra.mxu0 %v611
    %643 = vmatprep.subr.mxu0 0.0
    %644 = vmatpush1.msra.mxu0 %v612
    %645 = vmatprep.subr.mxu0 0.0
    %646 = vmatpush1.msra.mxu0 %v613
    %647 = vmatprep.subr.mxu0 0.0
    %648 = vmatpush1.msra.mxu0 %v614
    %649 = vmatprep.subr.mxu0 0.0
    %650 = vmatpush1.msra.mxu0 %v615
    %651 = vmatprep.subr.mxu0 0.0
    %652 = vmatpush1.msra.mxu0 %v616
    %653 = vmatprep.subr.mxu0 0.0
    %654 = vmatpush1.msra.mxu0 %v617
    %655 = vmatprep.subr.mxu0 0.0
    %656 = vmatpush1.msra.mxu0 %v618
    %657 = vmatprep.subr.mxu0 0.0
    %658 = vmatpush1.msra.mxu0 %v619
    %659 = vmatprep.subr.mxu0 0.0
    %660 = vmatpush1.msra.mxu0 0.0
    %661 = vmatprep.subr.mxu0 0.0
    %662 = vmatpush1.msra.mxu0 0.0
    %663 = vmatprep.subr.mxu0 0.0
    %664 = vmatpush1.msra.mxu0 0.0
    %665 = vmatprep.subr.mxu0 0.0
    %666 = vmatpush1.msra.mxu0 0.0
    %667 = vmatprep.subr.mxu0 0.0
    %668 = vmatpush1.msra.mxu0 0.0
    %669 = vmatprep.subr.mxu0 0.0
    %670 = vmatpush1.msra.mxu0 0.0
    %671 = vmatprep.subr.mxu0 0.0
    %672 = vmatpush1.msra.mxu0 0.0
    %673 = vmatprep.subr.mxu0 0.0
    %674 = vmatpush1.msra.mxu0 0.0
    %675 = vmatprep.subr.mxu0 0.0
    %676 = vmatpush1.msra.mxu0 0.0
    %677 = vmatprep.subr.mxu0 0.0
    %678 = vmatpush1.msra.mxu0 0.0
    %679 = vmatprep.subr.mxu0 0.0
    %680 = vmatpush1.msra.mxu0 0.0
    %681 = vmatprep.subr.mxu0 0.0
    %682 = vmatpush1.msra.mxu0 0.0
    %683 = vmatprep.subr.mxu0 0.0
    %684 = vmatpush1.msra.mxu0 0.0
    %685 = vmatprep.subr.mxu0 0.0
    %686 = vmatpush1.msra.mxu0 0.0
    %687 = vmatprep.subr.mxu0 0.0
    %688 = vmatpush1.msra.mxu0 0.0
    %689 = vmatprep.subr.mxu0 0.0
    %690 = vmatpush1.msra.mxu0 0.0
    %691 = vmatprep.mubr.f32.mxu0 0.0
    %692 = vmatmul.mubr.f32.gmra.mrb[0].mxu0 %v602
    %v693 = vpop.f32.mrb[0].mxu0
    %v694 = vadd.f32 %v625, %v693
    %v695 = vpop.f32.mrb[0].mxu0
    %696 = vmatprep.mubr.f32.mxu0 0.0
    %697 = vmatmul.mubr.f32.gmra.mrb[0].mxu0 %v603
    %v698 = vpop.f32.mrb[0].mxu0
    %v699 = vadd.f32 %v625, %v698
    %v700 = vpop.f32.mrb[0].mxu0
    %701 = vdwg.mxu0
    %702 = vst [vmem:[#allocation14] sm:$0xff] %v694
    %703 = vst [vmem:[#allocation14 + $0x8] sm:$0xff] %v699
    // Predicated region
    $region90: #{tpu_custom_call.1} parent=1 // pred_check
      _
    $region91: #{tpu_custom_call.1} parent=1 // pred_check_branch
      %705 = sbr.rel (0) target = $region93
    $region92: #{tpu_custom_call.1} parent=1 // pred_region
      %s707 = ssub.s32 256, 256
      %708 = vsyncadd [#allocation4], %s707
      %s709 = sshll.u32 [#allocation14], 4
      %s710 = int_to_ptr.vmem [resolvable:$true] %s709
      %715 = dma.vmem_to_hbm [thread:$0]  %s710, 256, %s15, [#allocation4], 128, 128, 8
    $region93: #{tpu_custom_call.1} parent=1 // pred_fallthru
      _
    // Predicated region
    $region94: #{tpu_custom_call.1} parent=1 // pred_check
      _
    $region95: #{tpu_custom_call.1} parent=1 // pred_check_branch
      %717 = sbr.rel (0) target = $region97
    $region96: #{tpu_custom_call.1} parent=1 // pred_region
      %718 = dma.done [#allocation4], 256
    $region97: #{tpu_custom_call.1} parent=1 // pred_fallthru
      _
    %719 = vsyncpa [#allocation3], 1
    %720 = vsyncpa [#allocation6], 1
    %721 = vsyncpa [#allocation9], 1
    %722 = vsyncpa [#allocation12], 1
    %723 = vsyncpa [#allocation4], 1

</llo_original>
